<compile_context>
chip_gen: v7x
topology: tpu7x:2x2x1
jax: 0.10.0
libtpu: 0.0.40
codegen_flags: <defaults>
</compile_context>

<pallas_src>
import jax
import jax.numpy as jnp
from jax.experimental import pallas as pl
from jax.experimental.pallas import tpu as pltpu


# ------------------------- kernel 1: spectral diffusion ----------------------
def _spectral_wide_kernel(mf_ref, evecs_ref, evals_ref, t_ref, are_ref, aim_ref,
                          fd_ref, fdre_ref, fdim_ref):
    # mf_ref:    [1, V, C] bf16   mass * feat
    # evecs_ref: [1, V, K] bf16
    # evals_ref: [1, K, 1] f32
    # t_ref:     [1, C]    f32    learned per-channel diffusion time
    # are/aim:   [C, C]    f32    SpatialGradientFeatures weights (in, out)
    # outputs:   [1, V, C] bf16   fd, fd@A_re, fd@A_im
    bf16, f32 = jnp.bfloat16, jnp.float32
    evecs = evecs_ref[0]                                            # [V, K]

    # to_basis: evecs^T @ (mass * feat) -> [K, C]
    # (in-kernel transpose: avoids a duplicate transposed evecs copy in HBM/VMEM)
    spec = jnp.dot(evecs.T, mf_ref[0], preferred_element_type=f32)

    # diffusion coefficients exp(-evals * clamp(t, 1e-8)) -> [K, C]
    t = jnp.maximum(t_ref[...], 1e-8)
    coefs = jnp.exp(-evals_ref[0] * t)

    # from_basis: evecs @ (coefs * spec) -> [V, C]
    fd = jnp.dot(evecs, (coefs * spec).astype(bf16), preferred_element_type=f32)

    # Pre-apply the gradient-feature linear maps once per batch element
    # (associativity folds them out of the per-tile gradient kernel).
    fd_re = jnp.dot(fd, are_ref[...], preferred_element_type=f32)
    fd_im = jnp.dot(fd, aim_ref[...], preferred_element_type=f32)

    fd_ref[0] = fd.astype(bf16)
    fdre_ref[0] = fd_re.astype(bf16)
    fdim_ref[0] = fd_im.astype(bf16)


# --------------------- kernel 2: gradient features + MLP ---------------------
def _grad_mlp_kernel(feat_ref, wide_ref, gx_ref, gy_ref,
                     w1_ref, b1_ref, w2_ref, b2_ref, out_ref):
    # feat_ref: [1, tv, C]  f32   row tile (MLP input + residual)
    # wide_ref: [1, V, 3C]  bf16  [fd | fd@A_re | fd@A_im], resident per batch
    # gx_ref:   [1, tv, V]  bf16  gradX row tile
    # gy_ref:   [1, tv, V]  bf16  gradY row tile
    # w1_ref:   [3, C, H]   bf16  MLP layer-0 weight split: [feat | fd | grad]
    # b1_ref:   [1, H] f32 ; w2_ref: [H, C] bf16 ; b2_ref: [1, C] f32
    # out_ref:  [1, tv, C]  f32
    f32, bf16 = jnp.float32, jnp.bfloat16
    tv, C = out_ref.shape[1], out_ref.shape[2]

    wide = wide_ref[0]                                              # [V, 3C] bf16
    # One wide-N MXU stream per gradient operator tile (N = 3C).
    rx = jnp.dot(gx_ref[0], wide, preferred_element_type=f32)       # [tv, 3C]
    ry = jnp.dot(gy_ref[0], wide, preferred_element_type=f32)       # [tv, 3C]
    g_x, gx_re = rx[:, :C], rx[:, C:2 * C]                          # gradX@fd, A_re(gradX@fd)
    g_y, gy_im = ry[:, :C], ry[:, 2 * C:]                           # gradY@fd, A_im(gradY@fd)

    # SpatialGradientFeatures (with_gradient_rotations=True):
    #   real_b = A_re(g_x) - A_im(g_y) ; img_b = A_re(g_x) + A_im(g_y)
    feat_real_b = gx_re - gy_im
    feat_img_b = gx_re + gy_im
    grad_feat = jnp.tanh(g_x * feat_real_b + g_y * feat_img_b)      # [tv, C] f32

    # feat_diffuse tile for the MLP: rows of the first C lanes of the wide RHS.
    row0 = pl.multiple_of(pl.program_id(1) * tv, tv)
    fd_tile = wide_ref[0, pl.ds(row0, tv), :][:, :C]                # [tv, C] bf16

    feat_tile = feat_ref[0]                                         # [tv, C] f32
    # MiniMLP: concat replaced by three accumulating matmuls (W1 pre-split).
    # Dropout(p=0.5) is identity at inference time.
    h = (jnp.dot(feat_tile.astype(bf16), w1_ref[0], preferred_element_type=f32)
         + jnp.dot(fd_tile, w1_ref[1], preferred_element_type=f32)
         + jnp.dot(grad_feat.astype(bf16), w1_ref[2], preferred_element_type=f32)
         + b1_ref[...])
    h = jnp.maximum(h, 0.0)                                         # ReLU
    mlp = jnp.dot(h.astype(bf16), w2_ref[...], preferred_element_type=f32) + b2_ref[...]

    # Residual kept in f32.
    out_ref[0] = (mlp + feat_tile).astype(out_ref.dtype)


# ------------------------------ tuning helpers --------------------------------
def _vmem_limit_bytes():
    """Generation-aware VMEM budget (v7x: 64 MiB physical; v5e/v6e: 128 MiB)."""
    try:
        kind = jax.devices()[0].device_kind.lower()
    except Exception:
        kind = ""
    if "7" in kind:
        return 48 * 1024 * 1024
    return 96 * 1024 * 1024


def _choose_row_tile(V, C, H, vmem_limit, wide_buffers=1):
    """Largest multiple-of-8 divisor of V such that the double-buffered
    gradX/gradY row tiles fit after budgeting the batch-resident wide RHS,
    MLP params, and the double-buffered feat/out tiles."""
    if V % 8 != 0:
        return V
    resident = wide_buffers * V * 3 * C * 2                 # wide RHS (bf16)
    resident += (3 * C * H + H * C) * 2 + (H + C) * 4       # MLP params
    budget = int(vmem_limit * 0.7) - resident
    per_row = 2 * 2 * V * 2                                  # gradX+gradY, 2 bufs, bf16
    per_row += 2 * 2 * C * 4                                 # feat-in + out tiles, f32
    tv_max = max(8, budget // max(per_row, 1))
    tv_max = min((tv_max // 8) * 8, V)
    tv_max = max(tv_max, 8)
    for tv in range(tv_max, 7, -8):
        if V % tv == 0:
            return tv
    return V


# --------------------------------- wrapper -------------------------------------
def diffusionnet_block(feat, mass, evals, evecs, gradX, gradY, params, tv=None):
    """feat: [B,V,C]; mass: [B,V]; evals: [B,K]; evecs: [B,V,K];
    gradX/gradY: dense [B,V,V]; params dict (weights stored (in, out)).
    Returns [B,V,C] float32."""
    B, V, C = feat.shape
    K = evals.shape[1]
    H = params["w1"].shape[1]
    f32, bf16 = jnp.float32, jnp.bfloat16
    vmem_limit = _vmem_limit_bytes()

    # ---------- kernel 1: spectral diffusion + pre-applied A_re / A_im ----------
    mf = (mass[..., None].astype(f32) * feat.astype(f32)).astype(bf16)  # fold mass here
    evecs_b = evecs.astype(bf16)
    evals_r = evals.reshape(B, K, 1).astype(f32)
    t = params["t"].reshape(1, C).astype(f32)
    a_re = params["a_re"].astype(f32)
    a_im = params["a_im"].astype(f32)

    fd_b, fdre_b, fdim_b = pl.pallas_call(
        _spectral_wide_kernel,
        out_shape=(jax.ShapeDtypeStruct((B, V, C), bf16),
                   jax.ShapeDtypeStruct((B, V, C), bf16),
                   jax.ShapeDtypeStruct((B, V, C), bf16)),
        grid_spec=pltpu.PrefetchScalarGridSpec(
            num_scalar_prefetch=0,
            grid=(B,),
            in_specs=[
                pl.BlockSpec((1, V, C), lambda b: (b, 0, 0)),   # mass * feat
                pl.BlockSpec((1, V, K), lambda b: (b, 0, 0)),   # evecs
                pl.BlockSpec((1, K, 1), lambda b: (b, 0, 0)),   # evals
                pl.BlockSpec((1, C), lambda b: (0, 0)),         # diffusion time
                pl.BlockSpec((C, C), lambda b: (0, 0)),         # A_re
                pl.BlockSpec((C, C), lambda b: (0, 0)),         # A_im
            ],
            out_specs=[pl.BlockSpec((1, V, C), lambda b: (b, 0, 0)),
                       pl.BlockSpec((1, V, C), lambda b: (b, 0, 0)),
                       pl.BlockSpec((1, V, C), lambda b: (b, 0, 0))],
        ),
        compiler_params=pltpu.CompilerParams(
            dimension_semantics=("parallel",),
            vmem_limit_bytes=vmem_limit),
        cost_estimate=pl.CostEstimate(
            flops=int(B * (4 * V * K * C + 4 * V * C * C)),
            transcendentals=int(B * K * C),
            bytes_accessed=int(B * (V * C * 2 + V * K * 2 + 3 * V * C * 2
                                    + K * 4 + (2 * C * C + C) * 4)),
        ),
    )(mf, evecs_b, evals_r, t, a_re, a_im)
    # TODO(synk): at production V (>~10k vertices) this spectral call should be
    # row-tiled over V (or replaced by XLA einsums); at these sizes the full
    # [V,K]/[V,C] blocks comfortably fit VMEM.

    # Wide RHS for the gradient stage: [fd | fd@A_re | fd@A_im]  (bf16, O(V*C) pass).
    wide = jnp.concatenate([fd_b, fdre_b, fdim_b], axis=-1)          # [B, V, 3C]

    # ---------- kernel 2: tiled gradient features + MiniMLP + residual ----------
    if tv is None:
        tv = _choose_row_tile(V, C, H, vmem_limit)
    assert V % tv == 0 and (tv % 8 == 0 or tv == V), "bad row tile"
    NT = V // tv

    feat_f = feat.astype(f32)
    gx_b = gradX.astype(bf16)
    gy_b = gradY.astype(bf16)
    w1_split = params["w1"].astype(bf16).reshape(3, C, H)            # split along 3C
    b1 = params["b1"].reshape(1, H).astype(f32)
    w2 = params["w2"].astype(bf16)
    b2 = params["b2"].reshape(1, C).astype(f32)

    def _run(single_buffer):
        def const_spec(shape, index_map):
            # Batch-constant operands: single-buffer to halve their VMEM residency.
            if single_buffer and hasattr(pl, "Buffered"):
                return pl.BlockSpec(shape, index_map, pipeline_mode=pl.Buffered(1))
            return pl.BlockSpec(shape, index_map)

        grid_spec = pltpu.PrefetchScalarGridSpec(
            num_scalar_prefetch=0,
            grid=(B, NT),
            in_specs=[
                pl.BlockSpec((1, tv, C), lambda b, j: (b, j, 0)),    # feat row tile
                const_spec((1, V, 3 * C), lambda b, j: (b, 0, 0)),   # wide RHS (resident)
                pl.BlockSpec((1, tv, V), lambda b, j: (b, j, 0)),    # gradX row tile
                pl.BlockSpec((1, tv, V), lambda b, j: (b, j, 0)),    # gradY row tile
                const_spec((3, C, H), lambda b, j: (0, 0, 0)),       # W1 (split)
                const_spec((1, H), lambda b, j: (0, 0)),             # b1
                const_spec((H, C), lambda b, j: (0, 0)),             # W2
                const_spec((1, C), lambda b, j: (0, 0)),             # b2
            ],
            out_specs=pl.BlockSpec((1, tv, C), lambda b, j: (b, j, 0)),
        )
        return pl.pallas_call(
            _grad_mlp_kernel,
            out_shape=jax.ShapeDtypeStruct((B, V, C), jnp.float32),
            grid_spec=grid_spec,
            compiler_params=pltpu.CompilerParams(
                # No carried state across row tiles -> both axes parallel
                # (keeps both v7x TensorCores busy even when B == 1).
                dimension_semantics=("parallel", "parallel"),
                vmem_limit_bytes=vmem_limit),
            cost_estimate=pl.CostEstimate(
                flops=int(B * (12 * V * V * C + 8 * V * C * H)),
                transcendentals=int(B * V * C),
                # Batch-resident operands counted once per batch element (not x NT).
                bytes_accessed=int(B * (2 * V * V * 2               # gradX + gradY (bf16)
                                        + V * 3 * C * 2             # wide RHS
                                        + 2 * V * C * 4             # feat in + out (f32)
                                        + (3 * C * H + H * C) * 2 + (H + C) * 4)),
            ),
        )(feat_f, wide, gx_b, gy_b, w1_split, b1, w2, b2)

    try:
        return _run(single_buffer=True)
    except Exception:
        # Fallback if pipeline_mode / pl.Buffered(1) is unsupported on this JAX/Mosaic.
        return _run(single_buffer=False)


# ----------------------------- pure-JAX reference ------------------------------
def reference(feat, mass, evals, evecs, gradX, gradY, params):
    t = jnp.maximum(params["t"].reshape(1, -1), 1e-8)                # [1, C]
    feat_spec = jnp.einsum("bvk,bvc->bkc", evecs, mass[..., None] * feat)
    coefs = jnp.exp(-evals[..., None] * t[0][None, None, :])
    feat_diffuse = jnp.einsum("bvk,bkc->bvc", evecs, coefs * feat_spec)
    g_x = jnp.einsum("bvw,bwc->bvc", gradX, feat_diffuse)
    g_y = jnp.einsum("bvw,bwc->bvc", gradY, feat_diffuse)
    re_b = g_x @ params["a_re"] - g_y @ params["a_im"]
    im_b = g_x @ params["a_re"] + g_y @ params["a_im"]
    grad_feat = jnp.tanh(g_x * re_b + g_y * im_b)
    combined = jnp.concatenate([feat, feat_diffuse, grad_feat], axis=-1)
    h = jnp.maximum(combined @ params["w1"] + params["b1"], 0.0)
    return h @ params["w2"] + params["b2"] + feat


# ----------------------------------- main ---------------------------------------
if __name__ == "__main__":
    B, V, K, C, H = 2, 64, 16, 16, 32

    key = jax.random.PRNGKey(0)
    ks = jax.random.split(key, 10)

    feat = jax.random.normal(ks[0], (B, V, C), dtype=jnp.float32)
    mass = jax.random.uniform(ks[1], (B, V), dtype=jnp.float32) + 0.5
    evals = jax.random.uniform(ks[2], (B, K), dtype=jnp.float32) * 2.0
    evecs = jax.random.normal(ks[3], (B, V, K), dtype=jnp.float32) * 0.1
    gradX = jax.random.normal(ks[4], (B, V, V), dtype=jnp.float32) * 0.05
    gradY = jax.random.normal(ks[5], (B, V, V), dtype=jnp.float32) * 0.05

    # Parameters stored (in, out); diffusion_time initialized to 0.0 as in the module.
    params = {
        "t":    jnp.zeros((1, C), dtype=jnp.float32),
        "a_re": jax.random.normal(ks[6], (C, C), dtype=jnp.float32) * 0.1,
        "a_im": jax.random.normal(ks[7], (C, C), dtype=jnp.float32) * 0.1,
        "w1":   jax.random.normal(ks[8], (3 * C, H), dtype=jnp.float32) * 0.1,
        "b1":   jnp.zeros((1, H), dtype=jnp.float32),
        "w2":   jax.random.normal(ks[9], (H, C), dtype=jnp.float32) * 0.1,
        "b2":   jnp.zeros((1, C), dtype=jnp.float32),
    }
    # TODO(synk): MiniMLP's Dropout(p=0.5) has no inference-time effect; omitted (identity).
    # NOTE: production configs should use C, H multiples of 128 for lane-dense stores.

    # tv=32 forces NT=2 row tiles at this toy V to exercise the tiled path.
    out = diffusionnet_block(feat, mass, evals, evecs, gradX, gradY, params, tv=32)
    out = jax.block_until_ready(out)

    # Reference consumes the same bf16-rounded heavy operands the kernel does
    # (evecs / gradX / gradY); remaining differences are the kernel's internal
    # bf16 rounding of intermediates and MLP weights (f32 accumulation throughout).
    r16 = lambda x: x.astype(jnp.bfloat16).astype(jnp.float32)
    ref = reference(feat, mass, evals, r16(evecs), r16(gradX), r16(gradY), params)

    assert out.shape == (B, V, C)
    max_err = float(jnp.max(jnp.abs(out - ref)))
    assert jnp.allclose(out, ref, atol=3e-2, rtol=3e-2), max_err

    print("KERNEL_OK")
</pallas_src>

<mosaic_0001>
module attributes {stable_mosaic.version = 11 : i64} {
  func.func @_spectral_wide_kernel(%arg0: i32, %arg1: memref<1x64x16xbf16, #tpu.memory_space<vmem>>, %arg2: memref<1x64x16xbf16, #tpu.memory_space<vmem>>, %arg3: memref<1x16x1xf32, #tpu.memory_space<vmem>>, %arg4: memref<1x16xf32, #tpu.memory_space<vmem>>, %arg5: memref<16x16xf32, #tpu.memory_space<vmem>>, %arg6: memref<16x16xf32, #tpu.memory_space<vmem>>, %arg7: memref<1x64x16xbf16, #tpu.memory_space<vmem>>, %arg8: memref<1x64x16xbf16, #tpu.memory_space<vmem>>, %arg9: memref<1x64x16xbf16, #tpu.memory_space<vmem>>) attributes {dimension_semantics = [#tpu.dimension_semantics<parallel>], iteration_bounds = array<i64: 2>, scalar_prefetch = 0 : i64, scratch_operands = 0 : i64, tpu.core_type = #tpu.core_type<tc>, window_params = [{transform_indices = @transform_0, window_bounds = array<i64: 1, 64, 16>}, {transform_indices = @transform_1, window_bounds = array<i64: 1, 64, 16>}, {transform_indices = @transform_2, window_bounds = array<i64: 1, 16, 1>}, {pipeline_mode = #tpu.pipeline_mode<synchronous>, transform_indices = @transform_3, window_bounds = array<i64: 1, 16>}, {pipeline_mode = #tpu.pipeline_mode<synchronous>, transform_indices = @transform_4, window_bounds = array<i64: 16, 16>}, {pipeline_mode = #tpu.pipeline_mode<synchronous>, transform_indices = @transform_5, window_bounds = array<i64: 16, 16>}, {transform_indices = @transform_6, window_bounds = array<i64: 1, 64, 16>}, {transform_indices = @transform_7, window_bounds = array<i64: 1, 64, 16>}, {transform_indices = @transform_8, window_bounds = array<i64: 1, 64, 16>}]} {
    %c0 = arith.constant 0 : index
    %c0_0 = arith.constant 0 : index
    %c0_1 = arith.constant 0 : index
    %0 = vector.load %arg2[%c0, %c0_0, %c0_1] : memref<1x64x16xbf16, #tpu.memory_space<vmem>>, vector<1x64x16xbf16>
    %1 = vector.shape_cast %0 : vector<1x64x16xbf16> to vector<64x16xbf16>
    %2 = tpu.transpose %1, [1, 0] : vector<64x16xbf16> -> vector<16x64xbf16>
    %c0_2 = arith.constant 0 : index
    %c0_3 = arith.constant 0 : index
    %c0_4 = arith.constant 0 : index
    %3 = vector.load %arg1[%c0_2, %c0_3, %c0_4] : memref<1x64x16xbf16, #tpu.memory_space<vmem>>, vector<1x64x16xbf16>
    %4 = vector.shape_cast %3 : vector<1x64x16xbf16> to vector<64x16xbf16>
    %cst = arith.constant dense<0.000000e+00> : vector<16x16xf32>
    %5 = tpu.matmul %2, %4, %cst {dimension_numbers = #tpu.dot_dimension_numbers<[1], [0], [0], [1], [0, 0, 1, 1], [], []>} : vector<16x64xbf16>, vector<64x16xbf16>, vector<16x16xf32> -> vector<16x16xf32>
    %c0_5 = arith.constant 0 : index
    %c0_6 = arith.constant 0 : index
    %6 = vector.load %arg4[%c0_5, %c0_6] : memref<1x16xf32, #tpu.memory_space<vmem>>, vector<1x16xf32>
    %cst_7 = arith.constant 9.99999993E-9 : f32
    %7 = vector.broadcast %cst_7 : f32 to vector<1x16xf32>
    %8 = arith.maximumf %6, %7 : vector<1x16xf32>
    %c0_8 = arith.constant 0 : index
    %c0_9 = arith.constant 0 : index
    %c0_10 = arith.constant 0 : index
    %9 = vector.load %arg3[%c0_8, %c0_9, %c0_10] : memref<1x16x1xf32, #tpu.memory_space<vmem>>, vector<1x16x1xf32>
    %10 = vector.shape_cast %9 : vector<1x16x1xf32> to vector<16x1xf32>
    %cst_11 = arith.constant 0.000000e+00 : f32
    %11 = vector.broadcast %cst_11 : f32 to vector<16x1xf32>
    %12 = arith.subf %11, %10 : vector<16x1xf32>
    %13 = vector.broadcast %12 : vector<16x1xf32> to vector<16x16xf32>
    %14 = vector.broadcast %8 : vector<1x16xf32> to vector<16x16xf32>
    %15 = arith.mulf %13, %14 : vector<16x16xf32>
    %16 = math.exp %15 : vector<16x16xf32>
    %17 = arith.mulf %16, %5 : vector<16x16xf32>
    %18 = arith.truncf %17 : vector<16x16xf32> to vector<16x16xbf16>
    %cst_12 = arith.constant dense<0.000000e+00> : vector<64x16xf32>
    %19 = tpu.matmul %1, %18, %cst_12 {dimension_numbers = #tpu.dot_dimension_numbers<[1], [0], [0], [1], [0, 0, 1, 1], [], []>} : vector<64x16xbf16>, vector<16x16xbf16>, vector<64x16xf32> -> vector<64x16xf32>
    %c0_13 = arith.constant 0 : index
    %c0_14 = arith.constant 0 : index
    %20 = vector.load %arg5[%c0_13, %c0_14] : memref<16x16xf32, #tpu.memory_space<vmem>>, vector<16x16xf32>
    %cst_15 = arith.constant dense<0.000000e+00> : vector<64x16xf32>
    %21 = tpu.matmul %19, %20, %cst_15 {dimension_numbers = #tpu.dot_dimension_numbers<[1], [0], [0], [1], [0, 0, 1, 1], [], []>} : vector<64x16xf32>, vector<16x16xf32>, vector<64x16xf32> -> vector<64x16xf32>
    %c0_16 = arith.constant 0 : index
    %c0_17 = arith.constant 0 : index
    %22 = vector.load %arg6[%c0_16, %c0_17] : memref<16x16xf32, #tpu.memory_space<vmem>>, vector<16x16xf32>
    %cst_18 = arith.constant dense<0.000000e+00> : vector<64x16xf32>
    %23 = tpu.matmul %19, %22, %cst_18 {dimension_numbers = #tpu.dot_dimension_numbers<[1], [0], [0], [1], [0, 0, 1, 1], [], []>} : vector<64x16xf32>, vector<16x16xf32>, vector<64x16xf32> -> vector<64x16xf32>
    %24 = arith.truncf %19 : vector<64x16xf32> to vector<64x16xbf16>
    %c0_19 = arith.constant 0 : index
    %c0_20 = arith.constant 0 : index
    %c0_21 = arith.constant 0 : index
    %25 = vector.load %arg7[%c0_19, %c0_20, %c0_21] : memref<1x64x16xbf16, #tpu.memory_space<vmem>>, vector<1x64x16xbf16>
    %26 = vector.shape_cast %25 : vector<1x64x16xbf16> to vector<64x16xbf16>
    %27 = vector.shape_cast %24 : vector<64x16xbf16> to vector<1x64x16xbf16>
    tpu.vector_store %arg7[%c0_19, %c0_20, %c0_21], %27 {strides = array<i32>} : memref<1x64x16xbf16, #tpu.memory_space<vmem>>, vector<1x64x16xbf16>,
    %28 = arith.truncf %21 : vector<64x16xf32> to vector<64x16xbf16>
    %c0_22 = arith.constant 0 : index
    %c0_23 = arith.constant 0 : index
    %c0_24 = arith.constant 0 : index
    %29 = vector.load %arg8[%c0_22, %c0_23, %c0_24] : memref<1x64x16xbf16, #tpu.memory_space<vmem>>, vector<1x64x16xbf16>
    %30 = vector.shape_cast %29 : vector<1x64x16xbf16> to vector<64x16xbf16>
    %31 = vector.shape_cast %28 : vector<64x16xbf16> to vector<1x64x16xbf16>
    tpu.vector_store %arg8[%c0_22, %c0_23, %c0_24], %31 {strides = array<i32>} : memref<1x64x16xbf16, #tpu.memory_space<vmem>>, vector<1x64x16xbf16>,
    %32 = arith.truncf %23 : vector<64x16xf32> to vector<64x16xbf16>
    %c0_25 = arith.constant 0 : index
    %c0_26 = arith.constant 0 : index
    %c0_27 = arith.constant 0 : index
    %33 = vector.load %arg9[%c0_25, %c0_26, %c0_27] : memref<1x64x16xbf16, #tpu.memory_space<vmem>>, vector<1x64x16xbf16>
    %34 = vector.shape_cast %33 : vector<1x64x16xbf16> to vector<64x16xbf16>
    %35 = vector.shape_cast %32 : vector<64x16xbf16> to vector<1x64x16xbf16>
    tpu.vector_store %arg9[%c0_25, %c0_26, %c0_27], %35 {strides = array<i32>} : memref<1x64x16xbf16, #tpu.memory_space<vmem>>, vector<1x64x16xbf16>,
    return
  }
  func.func @transform_0(%arg0: i32) -> (i32, i32, i32) {
    %c0_i32 = arith.constant 0 : i32
    %c0_i32_0 = arith.constant 0 : i32
    %c0_i32_1 = arith.constant 0 : i32
    return %arg0, %c0_i32, %c0_i32_0 : i32, i32, i32
  }
  func.func @transform_1(%arg0: i32) -> (i32, i32, i32) {
    %c0_i32 = arith.constant 0 : i32
    %c0_i32_0 = arith.constant 0 : i32
    %c0_i32_1 = arith.constant 0 : i32
    return %arg0, %c0_i32, %c0_i32_0 : i32, i32, i32
  }
  func.func @transform_2(%arg0: i32) -> (i32, i32, i32) {
    %c0_i32 = arith.constant 0 : i32
    %c0_i32_0 = arith.constant 0 : i32
    %c0_i32_1 = arith.constant 0 : i32
    return %arg0, %c0_i32, %c0_i32_0 : i32, i32, i32
  }
  func.func @transform_3(%arg0: i32) -> (i32, i32) {
    %c0_i32 = arith.constant 0 : i32
    %c0_i32_0 = arith.constant 0 : i32
    %c0_i32_1 = arith.constant 0 : i32
    return %c0_i32, %c0_i32_0 : i32, i32
  }
  func.func @transform_4(%arg0: i32) -> (i32, i32) {
    %c0_i32 = arith.constant 0 : i32
    %c0_i32_0 = arith.constant 0 : i32
    %c0_i32_1 = arith.constant 0 : i32
    return %c0_i32, %c0_i32_0 : i32, i32
  }
  func.func @transform_5(%arg0: i32) -> (i32, i32) {
    %c0_i32 = arith.constant 0 : i32
    %c0_i32_0 = arith.constant 0 : i32
    %c0_i32_1 = arith.constant 0 : i32
    return %c0_i32, %c0_i32_0 : i32, i32
  }
  func.func @transform_6(%arg0: i32) -> (i32, i32, i32) {
    %c0_i32 = arith.constant 0 : i32
    %c0_i32_0 = arith.constant 0 : i32
    %c0_i32_1 = arith.constant 0 : i32
    return %arg0, %c0_i32, %c0_i32_0 : i32, i32, i32
  }
  func.func @transform_7(%arg0: i32) -> (i32, i32, i32) {
    %c0_i32 = arith.constant 0 : i32
    %c0_i32_0 = arith.constant 0 : i32
    %c0_i32_1 = arith.constant 0 : i32
    return %arg0, %c0_i32, %c0_i32_0 : i32, i32, i32
  }
  func.func @transform_8(%arg0: i32) -> (i32, i32, i32) {
    %c0_i32 = arith.constant 0 : i32
    %c0_i32_0 = arith.constant 0 : i32
    %c0_i32_1 = arith.constant 0 : i32
    return %arg0, %c0_i32, %c0_i32_0 : i32, i32, i32
  }
}

</mosaic_0001>

<llo_original>
// kernel: tpu_custom_call.1
$region0: #{tpu_custom_call.1}
  #allocation0 [shape = 'u32[]', space=smem, size = 0x4, offset = 0x4, fixed_abs, tag = 'smem constant byte address 0x4 - core index']
  #allocation1 [shape = 'u32[144,128]{1,0:T(1,128)}', space=vmem, size = 0x12000, scoped, tag = 'internal scratch']
  %s0 = inlined_call_operand.hbm [shape: bf16[2,64,16], index: 0, kind: input, shape index: {}]
  %s1 = inlined_call_operand.hbm [shape: bf16[2,64,16], index: 1, kind: input, shape index: {}]
  %s2 = inlined_call_operand.hbm [shape: f32[2,16,1], index: 2, kind: input, shape index: {}]
  %s3 = inlined_call_operand.hbm [shape: f32[1,16], index: 3, kind: input, shape index: {}]
  %s4 = inlined_call_operand.hbm [shape: f32[16,16], index: 4, kind: input, shape index: {}]
  %s5 = inlined_call_operand.hbm [shape: f32[16,16], index: 5, kind: input, shape index: {}]
  %s6 = inlined_call_operand.hbm [shape: bf16[2,64,16], index: 6, kind: output, shape index: {0}]
  %s7 = inlined_call_operand.hbm [shape: bf16[2,64,16], index: 7, kind: output, shape index: {1}]
  %s8 = inlined_call_operand.hbm [shape: bf16[2,64,16], index: 8, kind: output, shape index: {2}]
  %9 = xla_tuple %s6, %s7, %s8
  %s10 = sld [smem:[#allocation0]]
  $region97: #{tpu_custom_call.1} parent=0
    _
  %s12 = ssub.s32 1, %s10
  %s13 = scalar_select 0, %s12, %s10
  $region1: #{tpu_custom_call.1} parent=0
    #allocation2 [shape = 'u8[32768]{0}', space=vmem, size = 0x8000, scoped, tag = 'input window, operand 0']
    #allocation3 [shape = 's32[2]{0}', space=sflag, size = 0x8, scoped, tag = 'scoped memory for tpu_custom_call.1']
    #allocation4 [shape = 's32[2]{0}', space=sflag, size = 0x8, scoped, tag = 'scoped memory for tpu_custom_call.1']
    #allocation5 [shape = 'u8[32768]{0}', space=vmem, size = 0x8000, scoped, tag = 'input window, operand 1']
    #allocation6 [shape = 's32[2]{0}', space=sflag, size = 0x8, scoped, tag = 'scoped memory for tpu_custom_call.1']
    #allocation7 [shape = 'u8[16384]{0}', space=vmem, size = 0x4000, scoped, tag = 'input window, operand 2']
    #allocation8 [shape = 'u8[512]{0}', space=vmem, size = 0x400, scoped, tag = 'input window, operand 3, single buffered']
    #allocation9 [shape = 's32[1]{0}', space=sflag, size = 0x4, scoped, tag = 'scoped memory for tpu_custom_call.1']
    #allocation10 [shape = 'u8[8192]{0}', space=vmem, size = 0x2000, scoped, tag = 'input window, operand 4, single buffered']
    #allocation11 [shape = 'u8[8192]{0}', space=vmem, size = 0x2000, scoped, tag = 'input window, operand 5, single buffered']
    #allocation12 [shape = 's32[1]{0}', space=sflag, size = 0x4, scoped, tag = 'scoped memory for tpu_custom_call.1']
    #allocation13 [shape = 'u8[32768]{0}', space=vmem, size = 0x8000, scoped, tag = 'output window, operand 0']
    #allocation14 [shape = 'u8[32768]{0}', space=vmem, size = 0x8000, scoped, tag = 'output window, operand 1']
    #allocation15 [shape = 's32[2]{0}', space=sflag, size = 0x8, scoped, tag = 'scoped memory for tpu_custom_call.1']
    #allocation16 [shape = 'u8[32768]{0}', space=vmem, size = 0x8000, scoped, tag = 'output window, operand 2']
    %14 = vsyncpa [#allocation3], 0
    %s15 = scalar_lea.sflag [#allocation3], 1
    %16 = vsyncpa %s15, 0
    %17 = vsyncpa [#allocation6], 0
    %s18 = scalar_lea.sflag [#allocation6], 1
    %19 = vsyncpa %s18, 0
    %20 = vsyncpa [#allocation9], 0
    %21 = vsyncpa [#allocation12], 0
    %22 = vsyncpa [#allocation4], 0
    %s23 = scalar_lea.sflag [#allocation4], 1
    %24 = vsyncpa %s23, 0
    %25 = vsyncpa [#allocation15], 0
    %s26 = scalar_lea.sflag [#allocation15], 1
    %27 = vsyncpa %s26, 0
    loop: start=0, step=1, limit=4
    $region2: #{tpu_custom_call.1} parent=1 // loop_pre_header
      _
    $region3: #{tpu_custom_call.1} parent=1 // loop_header
      %s29 = sphi 0, %s33
      %p30 = scmp.ge.s32.totalorder %s29, 4
      %s39 = sphi 0, %s41
      %s42 = sphi 0, %s39
      %s43 = sphi 0, %s42
      %s59 = sphi 0, %s43
      %s65 = sphi 0, %s67
      %s68 = sphi 0, %s65
      %s69 = sphi 0, %s68
      %s85 = sphi 0, %s69
      %s91 = sphi 0, %s93
      %s94 = sphi 0, %s91
      %s95 = sphi 0, %s94
      %s111 = sphi 0, %s95
      %s115 = sphi 0, %s115
      %s117 = sphi 0, %s115
      %s118 = sphi 0, %s117
      %s132 = sphi 0, %s118
      %s136 = sphi 0, %s136
      %s138 = sphi 0, %s136
      %s139 = sphi 0, %s138
      %s153 = sphi 0, %s139
      %s157 = sphi 0, %s157
      %s159 = sphi 0, %s157
      %s160 = sphi 0, %s159
      %s174 = sphi 0, %s160
      %s180 = sphi 0, %s182
      %s183 = sphi 0, %s180
      %s184 = sphi 0, %s183
      %s200 = sphi 0, %s184
      %s206 = sphi 0, %s208
      %s209 = sphi 0, %s206
      %s210 = sphi 0, %s209
      %s226 = sphi 0, %s210
      %s232 = sphi 0, %s234
      %s235 = sphi 0, %s232
      %s236 = sphi 0, %s235
      %s252 = sphi 0, %s236
    $region4: #{tpu_custom_call.1} parent=1 // loop_header_branch
      %32 = sbr.rel (%p30) target = $region8
    $region5: #{tpu_custom_call.1} parent=1 // loop_body
      %s34 = ssub.s32 %s29, 1
      %s35 = ssub.s32 %s29, 2
      %s36 = sadd.s32 %s29, 1
      %s37 = ssub.s32 %s29, %s36
      %p38 = scmp.eq.s32.totalorder %s37, 0
      %s40 = sadd.s32 %s39, 1
      %s41 = scalar_select %p38, %s39, %s40
      %p44 = pneg %p38
      %p45 = scmp.eq.s32.totalorder %s29, 1
      %p46 = por %p44, %p45
      %p47 = scmp.ne.s32.totalorder %s39, %s42
      %p48 = scmp.eq.s32.totalorder %s29, 0
      %p49 = por %p47, %p48
      %p50 = scmp.ne.s32.totalorder %s39, %s42
      %p51 = scmp.eq.s32.totalorder %s34, 1
      %p52 = por %p50, %p51
      %p53 = scmp.ne.s32.totalorder %s42, %s43
      %p54 = scmp.eq.s32.totalorder %s34, 0
      %p55 = por %p53, %p54
      %p56 = scmp.ne.s32.totalorder %s42, %s43
      %p57 = scmp.eq.s32.totalorder %s35, 1
      %p58 = por %p56, %p57
      %p60 = scmp.ne.s32.totalorder %s43, %s59
      %p61 = scmp.eq.s32.totalorder %s35, 0
      %p62 = por %p60, %p61
      %s63 = ssub.s32 %s29, %s36
      %p64 = scmp.eq.s32.totalorder %s63, 0
      %s66 = sadd.s32 %s65, 1
      %s67 = scalar_select %p64, %s65, %s66
      %p70 = pneg %p64
      %p71 = scmp.eq.s32.totalorder %s29, 1
      %p72 = por %p70, %p71
      %p73 = scmp.ne.s32.totalorder %s65, %s68
      %p74 = scmp.eq.s32.totalorder %s29, 0
      %p75 = por %p73, %p74
      %p76 = scmp.ne.s32.totalorder %s65, %s68
      %p77 = scmp.eq.s32.totalorder %s34, 1
      %p78 = por %p76, %p77
      %p79 = scmp.ne.s32.totalorder %s68, %s69
      %p80 = scmp.eq.s32.totalorder %s34, 0
      %p81 = por %p79, %p80
      %p82 = scmp.ne.s32.totalorder %s68, %s69
      %p83 = scmp.eq.s32.totalorder %s35, 1
      %p84 = por %p82, %p83
      %p86 = scmp.ne.s32.totalorder %s69, %s85
      %p87 = scmp.eq.s32.totalorder %s35, 0
      %p88 = por %p86, %p87
      %s89 = ssub.s32 %s29, %s36
      %p90 = scmp.eq.s32.totalorder %s89, 0
      %s92 = sadd.s32 %s91, 1
      %s93 = scalar_select %p90, %s91, %s92
      %p96 = pneg %p90
      %p97 = scmp.eq.s32.totalorder %s29, 1
      %p98 = por %p96, %p97
      %p99 = scmp.ne.s32.totalorder %s91, %s94
      %p100 = scmp.eq.s32.totalorder %s29, 0
      %p101 = por %p99, %p100
      %p102 = scmp.ne.s32.totalorder %s91, %s94
      %p103 = scmp.eq.s32.totalorder %s34, 1
      %p104 = por %p102, %p103
      %p105 = scmp.ne.s32.totalorder %s94, %s95
      %p106 = scmp.eq.s32.totalorder %s34, 0
      %p107 = por %p105, %p106
      %p108 = scmp.ne.s32.totalorder %s94, %s95
      %p109 = scmp.eq.s32.totalorder %s35, 1
      %p110 = por %p108, %p109
      %p112 = scmp.ne.s32.totalorder %s95, %s111
      %p113 = scmp.eq.s32.totalorder %s35, 0
      %p114 = por %p112, %p113
      %s116 = sadd.s32 %s115, 1
      %p119 = scmp.eq.s32.totalorder %s29, 1
      %p120 = scmp.ne.s32.totalorder %s115, %s117
      %p121 = scmp.eq.s32.totalorder %s29, 0
      %p122 = por %p120, %p121
      %p123 = scmp.ne.s32.totalorder %s115, %s117
      %p124 = scmp.eq.s32.totalorder %s34, 1
      %p125 = por %p123, %p124
      %p126 = scmp.ne.s32.totalorder %s117, %s118
      %p127 = scmp.eq.s32.totalorder %s34, 0
      %p128 = por %p126, %p127
      %p129 = scmp.ne.s32.totalorder %s117, %s118
      %p130 = scmp.eq.s32.totalorder %s35, 1
      %p131 = por %p129, %p130
      %p133 = scmp.ne.s32.totalorder %s118, %s132
      %p134 = scmp.eq.s32.totalorder %s35, 0
      %p135 = por %p133, %p134
      %s137 = sadd.s32 %s136, 1
      %p140 = scmp.eq.s32.totalorder %s29, 1
      %p141 = scmp.ne.s32.totalorder %s136, %s138
      %p142 = scmp.eq.s32.totalorder %s29, 0
      %p143 = por %p141, %p142
      %p144 = scmp.ne.s32.totalorder %s136, %s138
      %p145 = scmp.eq.s32.totalorder %s34, 1
      %p146 = por %p144, %p145
      %p147 = scmp.ne.s32.totalorder %s138, %s139
      %p148 = scmp.eq.s32.totalorder %s34, 0
      %p149 = por %p147, %p148
      %p150 = scmp.ne.s32.totalorder %s138, %s139
      %p151 = scmp.eq.s32.totalorder %s35, 1
      %p152 = por %p150, %p151
      %p154 = scmp.ne.s32.totalorder %s139, %s153
      %p155 = scmp.eq.s32.totalorder %s35, 0
      %p156 = por %p154, %p155
      %s158 = sadd.s32 %s157, 1
      %p161 = scmp.eq.s32.totalorder %s29, 1
      %p162 = scmp.ne.s32.totalorder %s157, %s159
      %p163 = scmp.eq.s32.totalorder %s29, 0
      %p164 = por %p162, %p163
      %p165 = scmp.ne.s32.totalorder %s157, %s159
      %p166 = scmp.eq.s32.totalorder %s34, 1
      %p167 = por %p165, %p166
      %p168 = scmp.ne.s32.totalorder %s159, %s160
      %p169 = scmp.eq.s32.totalorder %s34, 0
      %p170 = por %p168, %p169
      %p171 = scmp.ne.s32.totalorder %s159, %s160
      %p172 = scmp.eq.s32.totalorder %s35, 1
      %p173 = por %p171, %p172
      %p175 = scmp.ne.s32.totalorder %s160, %s174
      %p176 = scmp.eq.s32.totalorder %s35, 0
      %p177 = por %p175, %p176
      %s178 = ssub.s32 %s29, %s36
      %p179 = scmp.eq.s32.totalorder %s178, 0
      %s181 = sadd.s32 %s180, 1
      %s182 = scalar_select %p179, %s180, %s181
      %p185 = pneg %p179
      %p186 = scmp.eq.s32.totalorder %s29, 1
      %p187 = por %p185, %p186
      %p188 = scmp.ne.s32.totalorder %s180, %s183
      %p189 = scmp.eq.s32.totalorder %s29, 0
      %p190 = por %p188, %p189
      %p191 = scmp.ne.s32.totalorder %s180, %s183
      %p192 = scmp.eq.s32.totalorder %s34, 1
      %p193 = por %p191, %p192
      %p194 = scmp.ne.s32.totalorder %s183, %s184
      %p195 = scmp.eq.s32.totalorder %s34, 0
      %p196 = por %p194, %p195
      %p197 = scmp.ne.s32.totalorder %s183, %s184
      %p198 = scmp.eq.s32.totalorder %s35, 1
      %p199 = por %p197, %p198
      %p201 = scmp.ne.s32.totalorder %s184, %s200
      %p202 = scmp.eq.s32.totalorder %s35, 0
      %p203 = por %p201, %p202
      %s204 = ssub.s32 %s29, %s36
      %p205 = scmp.eq.s32.totalorder %s204, 0
      %s207 = sadd.s32 %s206, 1
      %s208 = scalar_select %p205, %s206, %s207
      %p211 = pneg %p205
      %p212 = scmp.eq.s32.totalorder %s29, 1
      %p213 = por %p211, %p212
      %p214 = scmp.ne.s32.totalorder %s206, %s209
      %p215 = scmp.eq.s32.totalorder %s29, 0
      %p216 = por %p214, %p215
      %p217 = scmp.ne.s32.totalorder %s206, %s209
      %p218 = scmp.eq.s32.totalorder %s34, 1
      %p219 = por %p217, %p218
      %p220 = scmp.ne.s32.totalorder %s209, %s210
      %p221 = scmp.eq.s32.totalorder %s34, 0
      %p222 = por %p220, %p221
      %p223 = scmp.ne.s32.totalorder %s209, %s210
      %p224 = scmp.eq.s32.totalorder %s35, 1
      %p225 = por %p223, %p224
      %p227 = scmp.ne.s32.totalorder %s210, %s226
      %p228 = scmp.eq.s32.totalorder %s35, 0
      %p229 = por %p227, %p228
      %s230 = ssub.s32 %s29, %s36
      %p231 = scmp.eq.s32.totalorder %s230, 0
      %s233 = sadd.s32 %s232, 1
      %s234 = scalar_select %p231, %s232, %s233
      %p237 = pneg %p231
      %p238 = scmp.eq.s32.totalorder %s29, 1
      %p239 = por %p237, %p238
      %p240 = scmp.ne.s32.totalorder %s232, %s235
      %p241 = scmp.eq.s32.totalorder %s29, 0
      %p242 = por %p240, %p241
      %p243 = scmp.ne.s32.totalorder %s232, %s235
      %p244 = scmp.eq.s32.totalorder %s34, 1
      %p245 = por %p243, %p244
      %p246 = scmp.ne.s32.totalorder %s235, %s236
      %p247 = scmp.eq.s32.totalorder %s34, 0
      %p248 = por %p246, %p247
      %p249 = scmp.ne.s32.totalorder %s235, %s236
      %p250 = scmp.eq.s32.totalorder %s35, 1
      %p251 = por %p249, %p250
      %p253 = scmp.ne.s32.totalorder %s236, %s252
      %p254 = scmp.eq.s32.totalorder %s35, 0
      %p255 = por %p253, %p254
      %p256 = scmp.le.s32.totalorder 1, %s29
      %p257 = scmp.lt.s32.totalorder %s29, 3
      %p258 = pnand %p256, %p257
      %p259 = pneg %p258
      // Predicated region
      $region9: #{tpu_custom_call.1} parent=5 // pred_check
        _
      $region10: #{tpu_custom_call.1} parent=5 // pred_check_branch
        %261 = sbr.rel (%p258) target = $region12
      $region11: #{tpu_custom_call.1} parent=5 // pred_region
        %s262 = ssub.s32 %s29, 1
        // Predicated region
        $region13: #{tpu_custom_call.1} parent=11 // pred_check
          %p263 = pneg %p128
        $region14: #{tpu_custom_call.1} parent=11 // pred_check_branch
          %265 = sbr.rel (%p263) target = $region16
        $region15: #{tpu_custom_call.1} parent=11 // pred_region
          %s267 = ssub.s32 16, 16
          %268 = vsyncadd [#allocation9], %s267
          %s270 = sshll.u32 [#allocation8], 4
          %s271 = int_to_ptr.vmem [resolvable:$true] %s270
          %273 = dma.hbm_to_vmem [thread:$0]  %s3, 16, %s271, [#allocation9]
        $region16: #{tpu_custom_call.1} parent=11 // pred_fallthru
          _
        // Predicated region
        $region17: #{tpu_custom_call.1} parent=11 // pred_check
          %p274 = pneg %p149
        $region18: #{tpu_custom_call.1} parent=11 // pred_check_branch
          %276 = sbr.rel (%p274) target = $region20
        $region19: #{tpu_custom_call.1} parent=11 // pred_region
          %s278 = ssub.s32 256, 256
          %279 = vsyncadd [#allocation9], %s278
          %s280 = sshll.u32 [#allocation10], 4
          %s281 = int_to_ptr.vmem [resolvable:$true] %s280
          %286 = dma.hbm_to_vmem [thread:$0]  %s4, 256, %s281, [#allocation9], 128, 128, 8
        $region20: #{tpu_custom_call.1} parent=11 // pred_fallthru
          _
        // Predicated region
        $region21: #{tpu_custom_call.1} parent=11 // pred_check
          %p287 = pneg %p170
        $region22: #{tpu_custom_call.1} parent=11 // pred_check_branch
          %289 = sbr.rel (%p287) target = $region24
        $region23: #{tpu_custom_call.1} parent=11 // pred_region
          %s291 = ssub.s32 256, 256
          %292 = vsyncadd [#allocation12], %s291
          %s293 = sshll.u32 [#allocation11], 4
          %s294 = int_to_ptr.vmem [resolvable:$true] %s293
          %299 = dma.hbm_to_vmem [thread:$0]  %s5, 256, %s294, [#allocation12], 128, 128, 8
        $region24: #{tpu_custom_call.1} parent=11 // pred_fallthru
          _
      $region12: #{tpu_custom_call.1} parent=5 // pred_fallthru
        _
      %p300 = scmp.lt.s32.totalorder %s29, 2
      // Predicated region
      $region25: #{tpu_custom_call.1} parent=5 // pred_check
        %p301 = pneg %p300
      $region26: #{tpu_custom_call.1} parent=5 // pred_check_branch
        %303 = sbr.rel (%p301) target = $region28
      $region27: #{tpu_custom_call.1} parent=5 // pred_region
        // Predicated region
        $region29: #{tpu_custom_call.1} parent=27 // pred_check
          %p304 = pneg %p49
        $region30: #{tpu_custom_call.1} parent=27 // pred_check_branch
          %306 = sbr.rel (%p304) target = $region32
        $region31: #{tpu_custom_call.1} parent=27 // pred_region
          %s307 = sand.u32 %s39, 1
          %s308 = scalar_lea.sflag [#allocation3], %s307
          %s309 = sand.u32 %s39, 1
          %s310 = smul.addr %s309, 32
          %s311 = scalar_lea.vmem [#allocation2], %s310
          %s313 = ssub.s32 512, 512
          %314 = vsyncadd %s308, %s313
          %s315 = smul.addr %s29, 8
          %s316 = smul.addr %s315, 64
          %s317 = scalar_lea.hbm %s0, %s316
          %s318 = sshll.u32 %s311, 4
          %s319 = int_to_ptr.vmem [resolvable:$true] %s318
          %324 = dma.hbm_to_vmem [thread:$0]  %s317, 512, %s319, %s308, 64, 64, 4
        $region32: #{tpu_custom_call.1} parent=27 // pred_fallthru
          _
        // Predicated region
        $region33: #{tpu_custom_call.1} parent=27 // pred_check
          %p325 = pneg %p75
        $region34: #{tpu_custom_call.1} parent=27 // pred_check_branch
          %327 = sbr.rel (%p325) target = $region36
        $region35: #{tpu_custom_call.1} parent=27 // pred_region
          %s328 = sand.u32 %s29, 1
          %s329 = scalar_lea.sflag [#allocation6], %s328
          %s330 = sand.u32 %s65, 1
          %s331 = smul.addr %s330, 32
          %s332 = scalar_lea.vmem [#allocation5], %s331
          %s334 = ssub.s32 512, 512
          %335 = vsyncadd %s329, %s334
          %s336 = smul.addr %s29, 8
          %s337 = smul.addr %s336, 64
          %s338 = scalar_lea.hbm %s1, %s337
          %s339 = sshll.u32 %s332, 4
          %s340 = int_to_ptr.vmem [resolvable:$true] %s339
          %345 = dma.hbm_to_vmem [thread:$0]  %s338, 512, %s340, %s329, 64, 64, 4
        $region36: #{tpu_custom_call.1} parent=27 // pred_fallthru
          _
        // Predicated region
        $region37: #{tpu_custom_call.1} parent=27 // pred_check
          %p346 = pneg %p101
        $region38: #{tpu_custom_call.1} parent=27 // pred_check_branch
          %348 = sbr.rel (%p346) target = $region40
        $region39: #{tpu_custom_call.1} parent=27 // pred_region
          %s349 = sand.u32 %s29, 1
          %s350 = scalar_lea.sflag [#allocation6], %s349
          %s351 = sand.u32 %s91, 1
          %s352 = smul.addr %s351, 16
          %s353 = scalar_lea.vmem [#allocation7], %s352
          %s355 = ssub.s32 256, 256
          %356 = vsyncadd %s350, %s355
          %s357 = smul.addr %s29, 2
          %s358 = smul.addr %s357, 128
          %s359 = scalar_lea.hbm %s2, %s358
          %s360 = sshll.u32 %s353, 4
          %s361 = int_to_ptr.vmem [resolvable:$true] %s360
          %366 = dma.hbm_to_vmem [thread:$0]  %s359, 256, %s361, %s350, 128, 128, 8
        $region40: #{tpu_custom_call.1} parent=27 // pred_fallthru
          _
      $region28: #{tpu_custom_call.1} parent=5 // pred_fallthru
        _
      %p367 = scmp.le.s32.totalorder 1, %s29
      %p368 = scmp.lt.s32.totalorder %s29, 3
      %p369 = pnand %p367, %p368
      %p370 = pneg %p369
      // Predicated region
      $region41: #{tpu_custom_call.1} parent=5 // pred_check
        _
      $region42: #{tpu_custom_call.1} parent=5 // pred_check_branch
        %372 = sbr.rel (%p369) target = $region44
      $region43: #{tpu_custom_call.1} parent=5 // pred_region
        %s373 = ssub.s32 %s29, 1
        %s374 = sand.u32 %s42, 1
        %s375 = scalar_lea.sflag [#allocation3], %s374
        %s376 = sand.u32 %s42, 1
        %s377 = smul.addr %s376, 32
        %s378 = scalar_lea.vmem [#allocation2], %s377
        // Predicated region
        $region45: #{tpu_custom_call.1} parent=43 // pred_check
          %p379 = pneg %p55
        $region46: #{tpu_custom_call.1} parent=43 // pred_check_branch
          %381 = sbr.rel (%p379) target = $region48
        $region47: #{tpu_custom_call.1} parent=43 // pred_region
          %382 = dma.done %s375, 512
        $region48: #{tpu_custom_call.1} parent=43 // pred_fallthru
          _
        %s383 = sand.u32 %s34, 1
        %s384 = scalar_lea.sflag [#allocation6], %s383
        %s385 = sand.u32 %s68, 1
        %s386 = smul.addr %s385, 32
        %s387 = scalar_lea.vmem [#allocation5], %s386
        // Predicated region
        $region49: #{tpu_custom_call.1} parent=43 // pred_check
          %p388 = pneg %p81
        $region50: #{tpu_custom_call.1} parent=43 // pred_check_branch
          %390 = sbr.rel (%p388) target = $region52
        $region51: #{tpu_custom_call.1} parent=43 // pred_region
          %391 = dma.done %s384, 512
        $region52: #{tpu_custom_call.1} parent=43 // pred_fallthru
          _
        %s392 = sand.u32 %s34, 1
        %s393 = scalar_lea.sflag [#allocation6], %s392
        %s394 = sand.u32 %s94, 1
        %s395 = smul.addr %s394, 16
        %s396 = scalar_lea.vmem [#allocation7], %s395
        // Predicated region
        $region53: #{tpu_custom_call.1} parent=43 // pred_check
          %p397 = pneg %p107
        $region54: #{tpu_custom_call.1} parent=43 // pred_check_branch
          %399 = sbr.rel (%p397) target = $region56
        $region55: #{tpu_custom_call.1} parent=43 // pred_region
          %400 = dma.done %s393, 256
        $region56: #{tpu_custom_call.1} parent=43 // pred_fallthru
          _
        // Predicated region
        $region57: #{tpu_custom_call.1} parent=43 // pred_check
          %p401 = pneg %p128
        $region58: #{tpu_custom_call.1} parent=43 // pred_check_branch
          %403 = sbr.rel (%p401) target = $region60
        $region59: #{tpu_custom_call.1} parent=43 // pred_region
          %404 = dma.done [#allocation9], 16
        $region60: #{tpu_custom_call.1} parent=43 // pred_fallthru
          _
        // Predicated region
        $region61: #{tpu_custom_call.1} parent=43 // pred_check
          %p405 = pneg %p149
        $region62: #{tpu_custom_call.1} parent=43 // pred_check_branch
          %407 = sbr.rel (%p405) target = $region64
        $region63: #{tpu_custom_call.1} parent=43 // pred_region
          %408 = dma.done [#allocation9], 256
        $region64: #{tpu_custom_call.1} parent=43 // pred_fallthru
          _
        // Predicated region
        $region65: #{tpu_custom_call.1} parent=43 // pred_check
          %p409 = pneg %p170
        $region66: #{tpu_custom_call.1} parent=43 // pred_check_branch
          %411 = sbr.rel (%p409) target = $region68
        $region67: #{tpu_custom_call.1} parent=43 // pred_region
          %412 = dma.done [#allocation12], 256
        $region68: #{tpu_custom_call.1} parent=43 // pred_fallthru
          _
        %s413 = sand.u32 %s42, 1
        %s414 = scalar_lea.sflag [#allocation3], %s413
        %s415 = sand.u32 %s42, 1
        %s416 = smul.addr %s415, 32
        %s417 = scalar_lea.vmem [#allocation2], %s416
        %p418 = pneg %p55
        %p419 = pneg %p52
        %s420 = sand.u32 %s34, 1
        %s421 = scalar_lea.sflag [#allocation6], %s420
        %s422 = sand.u32 %s68, 1
        %s423 = smul.addr %s422, 32
        %s424 = scalar_lea.vmem [#allocation5], %s423
        %p425 = pneg %p81
        %p426 = pneg %p78
        %s427 = sand.u32 %s34, 1
        %s428 = scalar_lea.sflag [#allocation6], %s427
        %s429 = sand.u32 %s94, 1
        %s430 = smul.addr %s429, 16
        %s431 = scalar_lea.vmem [#allocation7], %s430
        %p432 = pneg %p107
        %p433 = pneg %p104
        %p434 = pneg %p128
        %p435 = pneg %p125
        %p436 = pneg %p149
        %p437 = pneg %p146
        %p438 = pneg %p170
        %p439 = pneg %p167
        %p440 = pneg %p196
        %p441 = pneg %p193
        %s442 = sand.u32 %s183, 1
        %s443 = scalar_lea.sflag [#allocation4], %s442
        %s444 = sand.u32 %s183, 1
        %s445 = smul.addr %s444, 32
        %s446 = scalar_lea.vmem [#allocation13], %s445
        %p447 = pneg %p222
        %p448 = pneg %p219
        %s449 = sand.u32 %s34, 1
        %s450 = scalar_lea.sflag [#allocation15], %s449
        %s451 = sand.u32 %s209, 1
        %s452 = smul.addr %s451, 32
        %s453 = scalar_lea.vmem [#allocation14], %s452
        %p454 = pneg %p248
        %p455 = pneg %p245
        %s456 = sand.u32 %s34, 1
        %s457 = scalar_lea.sflag [#allocation15], %s456
        %s458 = sand.u32 %s235, 1
        %s459 = smul.addr %s458, 32
        %s460 = scalar_lea.vmem [#allocation16], %s459
        %v462 = vld [vmem:[%s387] sm:$0xf]
        %v463 = vld [vmem:[%s387 + $0x4] sm:$0xf]
        %v464 = vld [vmem:[%s387 + $0x8] sm:$0xf]
        %v465 = vld [vmem:[%s387 + $0xc] sm:$0xf]
        %v466 = vld [vmem:[%s387 + $0x10] sm:$0xf]
        %v467 = vld [vmem:[%s387 + $0x14] sm:$0xf]
        %v468 = vld [vmem:[%s387 + $0x18] sm:$0xf]
        %v469 = vld [vmem:[%s387 + $0x1c] sm:$0xf]
        %v478 = vunpack.c.l.b16 %v462
        %v479 = vunpack.c.l.b16 %v463
        %v480 = vunpack.c.l.b16 %v464
        %v481 = vunpack.c.l.b16 %v465
        %v482 = vunpack.c.l.b16 %v466
        %v483 = vunpack.c.l.b16 %v467
        %v484 = vunpack.c.l.b16 %v468
        %v485 = vunpack.c.l.b16 %v469
        %v486 = vpack.c.b16 %v479, %v478
        %v487 = vpack.c.b16 %v481, %v480
        %v488 = vpack.c.b16 %v483, %v482
        %v489 = vpack.c.b16 %v485, %v484
        %494 = vxpose.xlu0.c.b16.start [1/8] %v486, 128
        %495 = vxpose.xlu0.c.b16.cont [2/8] %v487, 128
        %496 = vxpose.xlu0.c.b16.cont [3/8] %v488, 128
        %497 = vxpose.xlu0.c.b16.cont [4/8] %v489, 128
        %498 = vxpose.xlu0.c.b16.cont [5/8] 0, 128
        %499 = vxpose.xlu0.c.b16.cont [6/8] 0, 128
        %500 = vxpose.xlu0.c.b16.cont [7/8] 0, 128
        %501 = vxpose.xlu0.c.b16.end [8/8] 0, 128
        %v502 = vpop.trf.xlu0
        %v503 = vpop.trf.xlu0
        %v504 = vpop.trf.xlu0
        %v505 = vpop.trf.xlu0
        %v506 = vpop.trf.xlu0
        %v507 = vpop.trf.xlu0
        %v508 = vpop.trf.xlu0
        %v509 = vpop.trf.xlu0
        %v510 = vld [vmem:[%s378] sm:$0xf]
        %v511 = vld [vmem:[%s378 + $0x4] sm:$0xf]
        %v512 = vld [vmem:[%s378 + $0x8] sm:$0xf]
        %v513 = vld [vmem:[%s378 + $0xc] sm:$0xf]
        %v514 = vld [vmem:[%s378 + $0x10] sm:$0xf]
        %v515 = vld [vmem:[%s378 + $0x14] sm:$0xf]
        %v516 = vld [vmem:[%s378 + $0x18] sm:$0xf]
        %v517 = vld [vmem:[%s378 + $0x1c] sm:$0xf]
        %v526 = vunpack.c.l.b16 %v510
        %v527 = vunpack.c.l.b16 %v511
        %v528 = vunpack.c.l.b16 %v512
        %v529 = vunpack.c.l.b16 %v513
        %v530 = vunpack.c.l.b16 %v514
        %v531 = vunpack.c.l.b16 %v515
        %v532 = vunpack.c.l.b16 %v516
        %v533 = vunpack.c.l.b16 %v517
        %v534 = vpack.c.b16 %v527, %v526
        %v535 = vpack.c.b16 %v529, %v528
        %v536 = vpack.c.b16 %v531, %v530
        %v537 = vpack.c.b16 %v533, %v532
        %vm542 = vcmask 523264
        %v544 = vsel %vm542, %v502, 0
        %546 = vmatprep.subr.bf16.mxu0 0
        %547 = vmatpush1.bf16.msra.mxu0 %v534
        %548 = vmatprep.subr.bf16.mxu0 0
        %549 = vmatpush1.bf16.msra.mxu0 %v535
        %550 = vmatprep.subr.bf16.mxu0 0
        %551 = vmatpush1.bf16.msra.mxu0 %v536
        %552 = vmatprep.subr.bf16.mxu0 0
        %553 = vmatpush1.bf16.msra.mxu0 %v537
        %554 = vmatprep.subr.bf16.mxu0 0
        %555 = vmatpush1.bf16.msra.mxu0 0
        %556 = vmatprep.subr.bf16.mxu0 0
        %557 = vmatpush1.bf16.msra.mxu0 0
        %558 = vmatprep.subr.bf16.mxu0 0
        %559 = vmatpush1.bf16.msra.mxu0 0
        %560 = vmatprep.subr.bf16.mxu0 0
        %561 = vmatpush1.bf16.msra.mxu0 0
        %562 = vmatprep.subr.bf16.mxu0 0
        %563 = vmatpush1.bf16.msra.mxu0 0
        %564 = vmatprep.subr.bf16.mxu0 0
        %565 = vmatpush1.bf16.msra.mxu0 0
        %566 = vmatprep.subr.bf16.mxu0 0
        %567 = vmatpush1.bf16.msra.mxu0 0
        %568 = vmatprep.subr.bf16.mxu0 0
        %569 = vmatpush1.bf16.msra.mxu0 0
        %570 = vmatprep.subr.bf16.mxu0 0
        %571 = vmatpush1.bf16.msra.mxu0 0
        %572 = vmatprep.subr.bf16.mxu0 0
        %573 = vmatpush1.bf16.msra.mxu0 0
        %574 = vmatprep.subr.bf16.mxu0 0
        %575 = vmatpush1.bf16.msra.mxu0 0
        %576 = vmatprep.subr.bf16.mxu0 0
        %577 = vmatpush1.bf16.msra.mxu0 0
        %578 = vmatprep.mubr.bf16.mxu0 0
        %579 = vmatmul.mubr.bf16.gmra.mrb[0].mxu0 %v544
        %v580 = vpop.f32.mrb[0].mxu0
        %v581 = vadd.f32 0.0, %v580
        %v582 = vpop.f32.mrb[0].mxu0
        %v583 = vpop.f32.mrb[0].mxu0
        %v584 = vadd.f32 0.0, %v583
        %v585 = vpop.f32.mrb[0].mxu0
        %586 = vdwg.mxu0
        %v587 = vld [vmem:[#allocation8] sm:$0x1]
        %v588 = vmax.f32 %v587, 1e-08
        %v589 = vld [vmem:[%s396] sm:$0xff]
        %v590 = vld [vmem:[%s396 + $0x8] sm:$0xff]
        %v591 = vsub.f32 0.0, %v589
        %v592 = vsub.f32 0.0, %v590
        %594 = vset.pattern.permute.xlu0 0
        %595 = vperm.xlu0 %594, %v591
        %v596 = vpop.permute.xlu0 %595
        %599 = vset.pattern.permute.xlu0 0
        %600 = vperm.xlu0 %599, %v592
        %v601 = vpop.permute.xlu0 %600
        %v604 = vlaneseq
        %v605 = vshrl.u32 %v604, 7
        %v606 = vsub.s32 0, %v605
        %v607 = vrot.slane %v588, %v606
        %v609 = vmul.f32 %v596, %v607
        %v610 = vmul.f32 %v601, %v607
        %v611 = vmul.f32 %v609, 1.442695
        %v612 = vpow.pop %v611
        %v613 = vmul.f32 %v610, 1.442695
        %v614 = vpow.pop %v613
        %v615 = vmul.f32 %v612, %v581
        %v616 = vmul.f32 %v614, %v584
        %v617 = vpack.c.bf16 %v616, %v615
        %vm618 = vcmask 130048
        %v620 = vsel %vm618, %v486, 0
        %v623 = vsel %vm618, %v487, 0
        %v626 = vsel %vm618, %v488, 0
        %v629 = vsel %vm618, %v489, 0
        %631 = vmatprep.subr.bf16.mxu0 0
        %632 = vmatpush1.bf16.msra.mxu0 %v617
        %633 = vmatprep.subr.bf16.mxu0 0
        %634 = vmatpush1.bf16.msra.mxu0 0
        %635 = vmatprep.subr.bf16.mxu0 0
        %636 = vmatpush1.bf16.msra.mxu0 0
        %637 = vmatprep.subr.bf16.mxu0 0
        %638 = vmatpush1.bf16.msra.mxu0 0
        %639 = vmatprep.subr.bf16.mxu0 0
        %640 = vmatpush1.bf16.msra.mxu0 0
        %641 = vmatprep.subr.bf16.mxu0 0
        %642 = vmatpush1.bf16.msra.mxu0 0
        %643 = vmatprep.subr.bf16.mxu0 0
        %644 = vmatpush1.bf16.msra.mxu0 0
        %645 = vmatprep.subr.bf16.mxu0 0
        %646 = vmatpush1.bf16.msra.mxu0 0
        %647 = vmatprep.subr.bf16.mxu0 0
        %648 = vmatpush1.bf16.msra.mxu0 0
        %649 = vmatprep.subr.bf16.mxu0 0
        %650 = vmatpush1.bf16.msra.mxu0 0
        %651 = vmatprep.subr.bf16.mxu0 0
        %652 = vmatpush1.bf16.msra.mxu0 0
        %653 = vmatprep.subr.bf16.mxu0 0
        %654 = vmatpush1.bf16.msra.mxu0 0
        %655 = vmatprep.subr.bf16.mxu0 0
        %656 = vmatpush1.bf16.msra.mxu0 0
        %657 = vmatprep.subr.bf16.mxu0 0
        %658 = vmatpush1.bf16.msra.mxu0 0
        %659 = vmatprep.subr.bf16.mxu0 0
        %660 = vmatpush1.bf16.msra.mxu0 0
        %661 = vmatprep.subr.bf16.mxu0 0
        %662 = vmatpush1.bf16.msra.mxu0 0
        %663 = vmatprep.mubr.bf16.mxu0 0
        %664 = vmatmul.mubr.bf16.gmra.mrb[0].mxu0 %v620
        %v665 = vpop.f32.mrb[0].mxu0
        %v666 = vadd.f32 0.0, %v665
        %v667 = vpop.f32.mrb[0].mxu0
        %v668 = vpop.f32.mrb[0].mxu0
        %v669 = vadd.f32 0.0, %v668
        %v670 = vpop.f32.mrb[0].mxu0
        %671 = vmatprep.mubr.bf16.mxu0 0
        %672 = vmatmul.mubr.bf16.gmra.mrb[0].mxu0 %v623
        %v673 = vpop.f32.mrb[0].mxu0
        %v674 = vadd.f32 0.0, %v673
        %v675 = vpop.f32.mrb[0].mxu0
        %v676 = vpop.f32.mrb[0].mxu0
        %v677 = vadd.f32 0.0, %v676
        %v678 = vpop.f32.mrb[0].mxu0
        %679 = vmatprep.mubr.bf16.mxu0 0
        %680 = vmatmul.mubr.bf16.gmra.mrb[0].mxu0 %v626
        %v681 = vpop.f32.mrb[0].mxu0
        %v682 = vadd.f32 0.0, %v681
        %v683 = vpop.f32.mrb[0].mxu0
        %v684 = vpop.f32.mrb[0].mxu0
        %v685 = vadd.f32 0.0, %v684
        %v686 = vpop.f32.mrb[0].mxu0
        %687 = vmatprep.mubr.bf16.mxu0 0
        %688 = vmatmul.mubr.bf16.gmra.mrb[0].mxu0 %v629
        %v689 = vpop.f32.mrb[0].mxu0
        %v690 = vadd.f32 0.0, %v689
        %v691 = vpop.f32.mrb[0].mxu0
        %v692 = vpop.f32.mrb[0].mxu0
        %v693 = vadd.f32 0.0, %v692
        %v694 = vpop.f32.mrb[0].mxu0
        %695 = vdwg.mxu0
        %v696 = vld [vmem:[#allocation10] sm:$0xff]
        %v697 = vld [vmem:[#allocation10 + $0x8] sm:$0xff]
        %v699 = vsel %vm618, %v666, 0
        %v702 = vsel %vm618, %v669, 0
        %v705 = vsel %vm618, %v674, 0
        %v708 = vsel %vm618, %v677, 0
        %v711 = vsel %vm618, %v682, 0
        %v714 = vsel %vm618, %v685, 0
        %v717 = vsel %vm618, %v690, 0
        %v720 = vsel %vm618, %v693, 0
        %722 = vmatprep.subr.mxu0 0.0
        %723 = vmatpush1.msra.mxu0 %v696
        %724 = vmatprep.subr.mxu0 0.0
        %725 = vmatpush1.msra.mxu0 %v697
        %726 = vmatprep.subr.mxu0 0.0
        %727 = vmatpush1.msra.mxu0 0.0
        %728 = vmatprep.subr.mxu0 0.0
        %729 = vmatpush1.msra.mxu0 0.0
        %730 = vmatprep.subr.mxu0 0.0
        %731 = vmatpush1.msra.mxu0 0.0
        %732 = vmatprep.subr.mxu0 0.0
        %733 = vmatpush1.msra.mxu0 0.0
        %734 = vmatprep.subr.mxu0 0.0
        %735 = vmatpush1.msra.mxu0 0.0
        %736 = vmatprep.subr.mxu0 0.0
        %737 = vmatpush1.msra.mxu0 0.0
        %738 = vmatprep.subr.mxu0 0.0
        %739 = vmatpush1.msra.mxu0 0.0
        %740 = vmatprep.subr.mxu0 0.0
        %741 = vmatpush1.msra.mxu0 0.0
        %742 = vmatprep.subr.mxu0 0.0
        %743 = vmatpush1.msra.mxu0 0.0
        %744 = vmatprep.subr.mxu0 0.0
        %745 = vmatpush1.msra.mxu0 0.0
        %746 = vmatprep.subr.mxu0 0.0
        %747 = vmatpush1.msra.mxu0 0.0
        %748 = vmatprep.subr.mxu0 0.0
        %749 = vmatpush1.msra.mxu0 0.0
        %750 = vmatprep.subr.mxu0 0.0
        %751 = vmatpush1.msra.mxu0 0.0
        %752 = vmatprep.subr.mxu0 0.0
        %753 = vmatpush1.msra.mxu0 0.0
        %754 = vmatprep.subr.mxu0 0.0
        %755 = vmatpush1.msra.mxu0 0.0
        %756 = vmatprep.subr.mxu0 0.0
        %757 = vmatpush1.msra.mxu0 0.0
        %758 = vmatprep.subr.mxu0 0.0
        %759 = vmatpush1.msra.mxu0 0.0
        %760 = vmatprep.subr.mxu0 0.0
        %761 = vmatpush1.msra.mxu0 0.0
        %762 = vmatprep.subr.mxu0 0.0
        %763 = vmatpush1.msra.mxu0 0.0
        %764 = vmatprep.subr.mxu0 0.0
        %765 = vmatpush1.msra.mxu0 0.0
        %766 = vmatprep.subr.mxu0 0.0
        %767 = vmatpush1.msra.mxu0 0.0
        %768 = vmatprep.subr.mxu0 0.0
        %769 = vmatpush1.msra.mxu0 0.0
        %770 = vmatprep.subr.mxu0 0.0
        %771 = vmatpush1.msra.mxu0 0.0
        %772 = vmatprep.subr.mxu0 0.0
        %773 = vmatpush1.msra.mxu0 0.0
        %774 = vmatprep.subr.mxu0 0.0
        %775 = vmatpush1.msra.mxu0 0.0
        %776 = vmatprep.subr.mxu0 0.0
        %777 = vmatpush1.msra.mxu0 0.0
        %778 = vmatprep.subr.mxu0 0.0
        %779 = vmatpush1.msra.mxu0 0.0
        %780 = vmatprep.subr.mxu0 0.0
        %781 = vmatpush1.msra.mxu0 0.0
        %782 = vmatprep.subr.mxu0 0.0
        %783 = vmatpush1.msra.mxu0 0.0
        %784 = vmatprep.subr.mxu0 0.0
        %785 = vmatpush1.msra.mxu0 0.0
        %786 = vmatprep.mubr.f32.mxu0 0.0
        %787 = vmatmul.mubr.f32.gmra.mrb[0].mxu0 %v699
        %v788 = vpop.f32.mrb[0].mxu0
        %v789 = vadd.f32 0.0, %v788
        %v790 = vpop.f32.mrb[0].mxu0
        %791 = vmatprep.mubr.f32.mxu0 0.0
        %792 = vmatmul.mubr.f32.gmra.mrb[0].mxu0 %v702
        %v793 = vpop.f32.mrb[0].mxu0
        %v794 = vadd.f32 0.0, %v793
        %v795 = vpop.f32.mrb[0].mxu0
        %796 = vmatprep.mubr.f32.mxu0 0.0
        %797 = vmatmul.mubr.f32.gmra.mrb[0].mxu0 %v705
        %v798 = vpop.f32.mrb[0].mxu0
        %v799 = vadd.f32 0.0, %v798
        %v800 = vpop.f32.mrb[0].mxu0
        %801 = vmatprep.mubr.f32.mxu0 0.0
        %802 = vmatmul.mubr.f32.gmra.mrb[0].mxu0 %v708
        %v803 = vpop.f32.mrb[0].mxu0
        %v804 = vadd.f32 0.0, %v803
        %v805 = vpop.f32.mrb[0].mxu0
        %806 = vmatprep.mubr.f32.mxu0 0.0
        %807 = vmatmul.mubr.f32.gmra.mrb[0].mxu0 %v711
        %v808 = vpop.f32.mrb[0].mxu0
        %v809 = vadd.f32 0.0, %v808
        %v810 = vpop.f32.mrb[0].mxu0
        %811 = vmatprep.mubr.f32.mxu0 0.0
        %812 = vmatmul.mubr.f32.gmra.mrb[0].mxu0 %v714
        %v813 = vpop.f32.mrb[0].mxu0
        %v814 = vadd.f32 0.0, %v813
        %v815 = vpop.f32.mrb[0].mxu0
        %816 = vmatprep.mubr.f32.mxu0 0.0
        %817 = vmatmul.mubr.f32.gmra.mrb[0].mxu0 %v717
        %v818 = vpop.f32.mrb[0].mxu0
        %v819 = vadd.f32 0.0, %v818
        %v820 = vpop.f32.mrb[0].mxu0
        %821 = vmatprep.mubr.f32.mxu0 0.0
        %822 = vmatmul.mubr.f32.gmra.mrb[0].mxu0 %v720
        %v823 = vpop.f32.mrb[0].mxu0
        %v824 = vadd.f32 0.0, %v823
        %v825 = vpop.f32.mrb[0].mxu0
        %826 = vdwg.mxu0
        %v827 = vld [vmem:[#allocation11] sm:$0xff]
        %v828 = vld [vmem:[#allocation11 + $0x8] sm:$0xff]
        %829 = vmatprep.subr.mxu0 0.0
        %830 = vmatpush1.msra.mxu0 %v827
        %831 = vmatprep.subr.mxu0 0.0
        %832 = vmatpush1.msra.mxu0 %v828
        %833 = vmatprep.subr.mxu0 0.0
        %834 = vmatpush1.msra.mxu0 0.0
        %835 = vmatprep.subr.mxu0 0.0
        %836 = vmatpush1.msra.mxu0 0.0
        %837 = vmatprep.subr.mxu0 0.0
        %838 = vmatpush1.msra.mxu0 0.0
        %839 = vmatprep.subr.mxu0 0.0
        %840 = vmatpush1.msra.mxu0 0.0
        %841 = vmatprep.subr.mxu0 0.0
        %842 = vmatpush1.msra.mxu0 0.0
        %843 = vmatprep.subr.mxu0 0.0
        %844 = vmatpush1.msra.mxu0 0.0
        %845 = vmatprep.subr.mxu0 0.0
        %846 = vmatpush1.msra.mxu0 0.0
        %847 = vmatprep.subr.mxu0 0.0
        %848 = vmatpush1.msra.mxu0 0.0
        %849 = vmatprep.subr.mxu0 0.0
        %850 = vmatpush1.msra.mxu0 0.0
        %851 = vmatprep.subr.mxu0 0.0
        %852 = vmatpush1.msra.mxu0 0.0
        %853 = vmatprep.subr.mxu0 0.0
        %854 = vmatpush1.msra.mxu0 0.0
        %855 = vmatprep.subr.mxu0 0.0
        %856 = vmatpush1.msra.mxu0 0.0
        %857 = vmatprep.subr.mxu0 0.0
        %858 = vmatpush1.msra.mxu0 0.0
        %859 = vmatprep.subr.mxu0 0.0
        %860 = vmatpush1.msra.mxu0 0.0
        %861 = vmatprep.subr.mxu0 0.0
        %862 = vmatpush1.msra.mxu0 0.0
        %863 = vmatprep.subr.mxu0 0.0
        %864 = vmatpush1.msra.mxu0 0.0
        %865 = vmatprep.subr.mxu0 0.0
        %866 = vmatpush1.msra.mxu0 0.0
        %867 = vmatprep.subr.mxu0 0.0
        %868 = vmatpush1.msra.mxu0 0.0
        %869 = vmatprep.subr.mxu0 0.0
        %870 = vmatpush1.msra.mxu0 0.0
        %871 = vmatprep.subr.mxu0 0.0
        %872 = vmatpush1.msra.mxu0 0.0
        %873 = vmatprep.subr.mxu0 0.0
        %874 = vmatpush1.msra.mxu0 0.0
        %875 = vmatprep.subr.mxu0 0.0
        %876 = vmatpush1.msra.mxu0 0.0
        %877 = vmatprep.subr.mxu0 0.0
        %878 = vmatpush1.msra.mxu0 0.0
        %879 = vmatprep.subr.mxu0 0.0
        %880 = vmatpush1.msra.mxu0 0.0
        %881 = vmatprep.subr.mxu0 0.0
        %882 = vmatpush1.msra.mxu0 0.0
        %883 = vmatprep.subr.mxu0 0.0
        %884 = vmatpush1.msra.mxu0 0.0
        %885 = vmatprep.subr.mxu0 0.0
        %886 = vmatpush1.msra.mxu0 0.0
        %887 = vmatprep.subr.mxu0 0.0
        %888 = vmatpush1.msra.mxu0 0.0
        %889 = vmatprep.subr.mxu0 0.0
        %890 = vmatpush1.msra.mxu0 0.0
        %891 = vmatprep.subr.mxu0 0.0
        %892 = vmatpush1.msra.mxu0 0.0
        %893 = vmatprep.mubr.f32.mxu0 0.0
        %894 = vmatmul.mubr.f32.gmra.mrb[0].mxu0 %v699
        %v895 = vpop.f32.mrb[0].mxu0
        %v896 = vadd.f32 0.0, %v895
        %v897 = vpop.f32.mrb[0].mxu0
        %898 = vmatprep.mubr.f32.mxu0 0.0
        %899 = vmatmul.mubr.f32.gmra.mrb[0].mxu0 %v702
        %v900 = vpop.f32.mrb[0].mxu0
        %v901 = vadd.f32 0.0, %v900
        %v902 = vpop.f32.mrb[0].mxu0
        %903 = vmatprep.mubr.f32.mxu0 0.0
        %904 = vmatmul.mubr.f32.gmra.mrb[0].mxu0 %v705
        %v905 = vpop.f32.mrb[0].mxu0
        %v906 = vadd.f32 0.0, %v905
        %v907 = vpop.f32.mrb[0].mxu0
        %908 = vmatprep.mubr.f32.mxu0 0.0
        %909 = vmatmul.mubr.f32.gmra.mrb[0].mxu0 %v708
        %v910 = vpop.f32.mrb[0].mxu0
        %v911 = vadd.f32 0.0, %v910
        %v912 = vpop.f32.mrb[0].mxu0
        %913 = vmatprep.mubr.f32.mxu0 0.0
        %914 = vmatmul.mubr.f32.gmra.mrb[0].mxu0 %v711
        %v915 = vpop.f32.mrb[0].mxu0
        %v916 = vadd.f32 0.0, %v915
        %v917 = vpop.f32.mrb[0].mxu0
        %918 = vmatprep.mubr.f32.mxu0 0.0
        %919 = vmatmul.mubr.f32.gmra.mrb[0].mxu0 %v714
        %v920 = vpop.f32.mrb[0].mxu0
        %v921 = vadd.f32 0.0, %v920
        %v922 = vpop.f32.mrb[0].mxu0
        %923 = vmatprep.mubr.f32.mxu0 0.0
        %924 = vmatmul.mubr.f32.gmra.mrb[0].mxu0 %v717
        %v925 = vpop.f32.mrb[0].mxu0
        %v926 = vadd.f32 0.0, %v925
        %v927 = vpop.f32.mrb[0].mxu0
        %928 = vmatprep.mubr.f32.mxu0 0.0
        %929 = vmatmul.mubr.f32.gmra.mrb[0].mxu0 %v720
        %v930 = vpop.f32.mrb[0].mxu0
        %v931 = vadd.f32 0.0, %v930
        %v932 = vpop.f32.mrb[0].mxu0
        %933 = vdwg.mxu0
        %v934 = vpack.c.bf16 %v669, %v666
        %v935 = vpack.c.bf16 %v677, %v674
        %v936 = vpack.c.bf16 %v685, %v682
        %v937 = vpack.c.bf16 %v693, %v690
        %v942 = vunpack.c.l.b16 %v934
        %v943 = vunpack.c.h.b16 %v934
        %v944 = vunpack.c.l.b16 %v935
        %v945 = vunpack.c.h.b16 %v935
        %v946 = vunpack.c.l.b16 %v936
        %v947 = vunpack.c.h.b16 %v936
        %v948 = vunpack.c.l.b16 %v937
        %v949 = vunpack.c.h.b16 %v937
        %v950 = vpack.c.b16 %v942, %v942
        %v951 = vpack.c.b16 %v943, %v943
        %v952 = vpack.c.b16 %v944, %v944
        %v953 = vpack.c.b16 %v945, %v945
        %v954 = vpack.c.b16 %v946, %v946
        %v955 = vpack.c.b16 %v947, %v947
        %v956 = vpack.c.b16 %v948, %v948
        %v957 = vpack.c.b16 %v949, %v949
        %vm966 = vcmask 125952
        %967 = vst.msk [vmem:[%s446] sm:$0xf] %vm966, %v950
        %968 = vst.msk [vmem:[%s446 + $0x4] sm:$0xf] %vm966, %v951
        %969 = vst.msk [vmem:[%s446 + $0x8] sm:$0xf] %vm966, %v952
        %970 = vst.msk [vmem:[%s446 + $0xc] sm:$0xf] %vm966, %v953
        %971 = vst.msk [vmem:[%s446 + $0x10] sm:$0xf] %vm966, %v954
        %972 = vst.msk [vmem:[%s446 + $0x14] sm:$0xf] %vm966, %v955
        %973 = vst.msk [vmem:[%s446 + $0x18] sm:$0xf] %vm966, %v956
        %974 = vst.msk [vmem:[%s446 + $0x1c] sm:$0xf] %vm966, %v957
        %v975 = vpack.c.bf16 %v794, %v789
        %v976 = vpack.c.bf16 %v804, %v799
        %v977 = vpack.c.bf16 %v814, %v809
        %v978 = vpack.c.bf16 %v824, %v819
        %v983 = vunpack.c.l.b16 %v975
        %v984 = vunpack.c.h.b16 %v975
        %v985 = vunpack.c.l.b16 %v976
        %v986 = vunpack.c.h.b16 %v976
        %v987 = vunpack.c.l.b16 %v977
        %v988 = vunpack.c.h.b16 %v977
        %v989 = vunpack.c.l.b16 %v978
        %v990 = vunpack.c.h.b16 %v978
        %v991 = vpack.c.b16 %v983, %v983
        %v992 = vpack.c.b16 %v984, %v984
        %v993 = vpack.c.b16 %v985, %v985
        %v994 = vpack.c.b16 %v986, %v986
        %v995 = vpack.c.b16 %v987, %v987
        %v996 = vpack.c.b16 %v988, %v988
        %v997 = vpack.c.b16 %v989, %v989
        %v998 = vpack.c.b16 %v990, %v990
        %1007 = vst.msk [vmem:[%s453] sm:$0xf] %vm966, %v991
        %1008 = vst.msk [vmem:[%s453 + $0x4] sm:$0xf] %vm966, %v992
        %1009 = vst.msk [vmem:[%s453 + $0x8] sm:$0xf] %vm966, %v993
        %1010 = vst.msk [vmem:[%s453 + $0xc] sm:$0xf] %vm966, %v994
        %1011 = vst.msk [vmem:[%s453 + $0x10] sm:$0xf] %vm966, %v995
        %1012 = vst.msk [vmem:[%s453 + $0x14] sm:$0xf] %vm966, %v996
        %1013 = vst.msk [vmem:[%s453 + $0x18] sm:$0xf] %vm966, %v997
        %1014 = vst.msk [vmem:[%s453 + $0x1c] sm:$0xf] %vm966, %v998
        %v1015 = vpack.c.bf16 %v901, %v896
        %v1016 = vpack.c.bf16 %v911, %v906
        %v1017 = vpack.c.bf16 %v921, %v916
        %v1018 = vpack.c.bf16 %v931, %v926
        %v1023 = vunpack.c.l.b16 %v1015
        %v1024 = vunpack.c.h.b16 %v1015
        %v1025 = vunpack.c.l.b16 %v1016
        %v1026 = vunpack.c.h.b16 %v1016
        %v1027 = vunpack.c.l.b16 %v1017
        %v1028 = vunpack.c.h.b16 %v1017
        %v1029 = vunpack.c.l.b16 %v1018
        %v1030 = vunpack.c.h.b16 %v1018
        %v1031 = vpack.c.b16 %v1023, %v1023
        %v1032 = vpack.c.b16 %v1024, %v1024
        %v1033 = vpack.c.b16 %v1025, %v1025
        %v1034 = vpack.c.b16 %v1026, %v1026
        %v1035 = vpack.c.b16 %v1027, %v1027
        %v1036 = vpack.c.b16 %v1028, %v1028
        %v1037 = vpack.c.b16 %v1029, %v1029
        %v1038 = vpack.c.b16 %v1030, %v1030
        %1047 = vst.msk [vmem:[%s460] sm:$0xf] %vm966, %v1031
        %1048 = vst.msk [vmem:[%s460 + $0x4] sm:$0xf] %vm966, %v1032
        %1049 = vst.msk [vmem:[%s460 + $0x8] sm:$0xf] %vm966, %v1033
        %1050 = vst.msk [vmem:[%s460 + $0xc] sm:$0xf] %vm966, %v1034
        %1051 = vst.msk [vmem:[%s460 + $0x10] sm:$0xf] %vm966, %v1035
        %1052 = vst.msk [vmem:[%s460 + $0x14] sm:$0xf] %vm966, %v1036
        %1053 = vst.msk [vmem:[%s460 + $0x18] sm:$0xf] %vm966, %v1037
        %1054 = vst.msk [vmem:[%s460 + $0x1c] sm:$0xf] %vm966, %v1038
        %s1055 = sand.u32 %s183, 1
        %s1056 = scalar_lea.sflag [#allocation4], %s1055
        %s1057 = sand.u32 %s183, 1
        %s1058 = smul.addr %s1057, 32
        %s1059 = scalar_lea.vmem [#allocation13], %s1058
        %s1060 = sand.u32 %s34, 1
        %s1061 = scalar_lea.sflag [#allocation15], %s1060
        %s1062 = sand.u32 %s209, 1
        %s1063 = smul.addr %s1062, 32
        %s1064 = scalar_lea.vmem [#allocation14], %s1063
        %s1065 = sand.u32 %s34, 1
        %s1066 = scalar_lea.sflag [#allocation15], %s1065
        %s1067 = sand.u32 %s235, 1
        %s1068 = smul.addr %s1067, 32
        %s1069 = scalar_lea.vmem [#allocation16], %s1068
        // Predicated region
        $region69: #{tpu_custom_call.1} parent=43 // pred_check
          %p1070 = pneg %p193
        $region70: #{tpu_custom_call.1} parent=43 // pred_check_branch
          %1072 = sbr.rel (%p1070) target = $region72
        $region71: #{tpu_custom_call.1} parent=43 // pred_region
          %s1074 = ssub.s32 512, 512
          %1075 = vsyncadd %s1056, %s1074
          %s1076 = smul.addr %s34, 8
          %s1077 = smul.addr %s1076, 64
          %s1078 = scalar_lea.hbm %s6, %s1077
          %s1079 = sshll.u32 %s1059, 4
          %s1080 = int_to_ptr.vmem [resolvable:$true] %s1079
          %1085 = dma.vmem_to_hbm [thread:$0]  %s1080, 512, %s1078, %s1056, 64, 64, 4
        $region72: #{tpu_custom_call.1} parent=43 // pred_fallthru
          _
        // Predicated region
        $region73: #{tpu_custom_call.1} parent=43 // pred_check
          %p1086 = pneg %p219
        $region74: #{tpu_custom_call.1} parent=43 // pred_check_branch
          %1088 = sbr.rel (%p1086) target = $region76
        $region75: #{tpu_custom_call.1} parent=43 // pred_region
          %s1090 = ssub.s32 512, 512
          %1091 = vsyncadd %s1061, %s1090
          %s1092 = smul.addr %s34, 8
          %s1093 = smul.addr %s1092, 64
          %s1094 = scalar_lea.hbm %s7, %s1093
          %s1095 = sshll.u32 %s1064, 4
          %s1096 = int_to_ptr.vmem [resolvable:$true] %s1095
          %1101 = dma.vmem_to_hbm [thread:$0]  %s1096, 512, %s1094, %s1061, 64, 64, 4
        $region76: #{tpu_custom_call.1} parent=43 // pred_fallthru
          _
        // Predicated region
        $region77: #{tpu_custom_call.1} parent=43 // pred_check
          %p1102 = pneg %p245
        $region78: #{tpu_custom_call.1} parent=43 // pred_check_branch
          %1104 = sbr.rel (%p1102) target = $region80
        $region79: #{tpu_custom_call.1} parent=43 // pred_region
          %s1106 = ssub.s32 512, 512
          %1107 = vsyncadd %s1066, %s1106
          %s1108 = smul.addr %s34, 8
          %s1109 = smul.addr %s1108, 64
          %s1110 = scalar_lea.hbm %s8, %s1109
          %s1111 = sshll.u32 %s1069, 4
          %s1112 = int_to_ptr.vmem [resolvable:$true] %s1111
          %1117 = dma.vmem_to_hbm [thread:$0]  %s1112, 512, %s1110, %s1066, 64, 64, 4
        $region80: #{tpu_custom_call.1} parent=43 // pred_fallthru
          _
      $region44: #{tpu_custom_call.1} parent=5 // pred_fallthru
        _
      %p1118 = scmp.le.s32.totalorder 2, %s29
      // Predicated region
      $region81: #{tpu_custom_call.1} parent=5 // pred_check
        %p1119 = pneg %p1118
      $region82: #{tpu_custom_call.1} parent=5 // pred_check_branch
        %1121 = sbr.rel (%p1119) target = $region84
      $region83: #{tpu_custom_call.1} parent=5 // pred_region
        %s1122 = ssub.s32 %s29, 2
        // Predicated region
        $region85: #{tpu_custom_call.1} parent=83 // pred_check
          %p1123 = pneg %p199
        $region86: #{tpu_custom_call.1} parent=83 // pred_check_branch
          %1125 = sbr.rel (%p1123) target = $region88
        $region87: #{tpu_custom_call.1} parent=83 // pred_region
          %s1126 = sand.u32 %s184, 1
          %s1127 = scalar_lea.sflag [#allocation4], %s1126
          %s1128 = sand.u32 %s184, 1
          %s1129 = smul.addr %s1128, 32
          %s1130 = scalar_lea.vmem [#allocation13], %s1129
          %1131 = dma.done %s1127, 512
        $region88: #{tpu_custom_call.1} parent=83 // pred_fallthru
          _
        // Predicated region
        $region89: #{tpu_custom_call.1} parent=83 // pred_check
          %p1132 = pneg %p225
        $region90: #{tpu_custom_call.1} parent=83 // pred_check_branch
          %1134 = sbr.rel (%p1132) target = $region92
        $region91: #{tpu_custom_call.1} parent=83 // pred_region
          %s1135 = sand.u32 %s35, 1
          %s1136 = scalar_lea.sflag [#allocation15], %s1135
          %s1137 = sand.u32 %s210, 1
          %s1138 = smul.addr %s1137, 32
          %s1139 = scalar_lea.vmem [#allocation14], %s1138
          %1140 = dma.done %s1136, 512
        $region92: #{tpu_custom_call.1} parent=83 // pred_fallthru
          _
        // Predicated region
        $region93: #{tpu_custom_call.1} parent=83 // pred_check
          %p1141 = pneg %p251
        $region94: #{tpu_custom_call.1} parent=83 // pred_check_branch
          %1143 = sbr.rel (%p1141) target = $region96
        $region95: #{tpu_custom_call.1} parent=83 // pred_region
          %s1144 = sand.u32 %s35, 1
          %s1145 = scalar_lea.sflag [#allocation15], %s1144
          %s1146 = sand.u32 %s236, 1
          %s1147 = smul.addr %s1146, 32
          %s1148 = scalar_lea.vmem [#allocation16], %s1147
          %1149 = dma.done %s1145, 512
        $region96: #{tpu_custom_call.1} parent=83 // pred_fallthru
          _
      $region84: #{tpu_custom_call.1} parent=5 // pred_fallthru
        _
    $region6: #{tpu_custom_call.1} parent=1 // loop_footer
      %s33 = sadd.s32 1, %s29
    $region7: #{tpu_custom_call.1} parent=1 // loop_footer_branch
      %28 = sbr.rel target = $region3
    $region8: #{tpu_custom_call.1} parent=1 // loop_exit
      _
    %1150 = vsyncpa [#allocation3], 1
    %s1151 = scalar_lea.sflag [#allocation3], 1
    %1152 = vsyncpa %s1151, 1
    %1153 = vsyncpa [#allocation6], 1
    %s1154 = scalar_lea.sflag [#allocation6], 1
    %1155 = vsyncpa %s1154, 1
    %1156 = vsyncpa [#allocation9], 1
    %1157 = vsyncpa [#allocation12], 1
    %1158 = vsyncpa [#allocation4], 1
    %s1159 = scalar_lea.sflag [#allocation4], 1
    %1160 = vsyncpa %s1159, 1
    %1161 = vsyncpa [#allocation15], 1
    %s1162 = scalar_lea.sflag [#allocation15], 1
    %1163 = vsyncpa %s1162, 1

</llo_original>
